<compile_context>
chip_gen: v7x
topology: tpu7x:2x2x1
jax: 0.10.0
libtpu: 0.0.40
codegen_flags: <defaults>
</compile_context>

<pallas_src>
from functools import partial

import jax
import jax.numpy as jnp
from jax import lax
from jax.experimental import pallas as pl
from jax.experimental.pallas import tpu as pltpu

NUM_HIDDEN = 99
HIDDEN = 4
SKIP_PERIOD = 5


def skipnet_kernel(x_ref, p_ref, o_ref):
    d_in = x_ref.shape[1]
    out_dim = o_ref.shape[0]

    x = x_ref[...]                                            # (B, D_in), B on sublanes

    # ---- input layer on the VPU/XLU (exact f32, no MXU warm-up) ------------
    blk0 = p_ref[0]                                           # (R, C)
    w_in_t = blk0[:HIDDEN, :d_in]                             # (4, D_in): rows j, lanes d
    b_in = blk0[:HIDDEN, d_in:d_in + 1]                       # (4, 1)
    xprod = w_in_t[:, None, :] * x[None, :, :]                # (4, B, D_in)
    h0 = jnp.maximum(jnp.sum(xprod, axis=-1) + b_in, 0.0)     # (4, B), batch on lanes

    # ---- one hidden layer: h[j,b] = relu(sum_k W[k,j] * act[k,b] + b[j]) ----
    def layer_fwd(idx, act):
        wb = p_ref[idx]                                       # (R, C) dynamic slab row
        w_t = wb[:HIDDEN, :HIDDEN]                            # (4(j), 4(k)) == W_i^T
        b = wb[:HIDDEN, HIDDEN:HIDDEN + 1]                    # (4(j), 1)
        prod = w_t[:, :, None] * act[None, :, :]              # (4(j), 4(k), B)
        s = jnp.sum(prod, axis=1)                             # reduce k (XLU) -> (4, B)
        return jnp.maximum(s + b, 0.0)

    # ---- 99 hidden layers: fori_loop over 5-layer skip periods --------------
    n_blocks = NUM_HIDDEN // SKIP_PERIOD                      # 19 full periods
    rem = NUM_HIDDEN - n_blocks * SKIP_PERIOD                 # 4-layer epilogue

    def block_body(t, carry):
        out, skip = carry
        base = 1 + t * SKIP_PERIOD                            # slab row of layer i = 5t
        out = layer_fwd(base, out)                            # i % 5 == 0: no residual
        for r in range(1, SKIP_PERIOD):                       # i % 5 != 0: residual add
            out = layer_fwd(base + r, out) + skip
            skip = out
        return out, skip

    out, skip = lax.fori_loop(0, n_blocks, block_body, (h0, h0))

    if rem > 0:                                               # layers 95..98
        base = 1 + n_blocks * SKIP_PERIOD
        out = layer_fwd(base, out)                            # i = 95: no residual
        for r in range(1, rem):                               # i = 96..98: residual add
            out = layer_fwd(base + r, out) + skip
            skip = out

    # ---- output layer (no activation): one dense (out_dim, B) store ---------
    wo = p_ref[NUM_HIDDEN + 1]
    w_out_t = wo[:out_dim, :HIDDEN]                           # (out_dim, 4)
    b_out = wo[:out_dim, HIDDEN:HIDDEN + 1]                   # (out_dim, 1)
    prod = w_out_t[:, :, None] * out[None, :, :]              # (out_dim, 4, B)
    o_ref[...] = jnp.sum(prod, axis=1) + b_out                # (out_dim, B)


@partial(jax.jit, static_argnums=(2,))
def skip_connection_forward(x, param_slab, out_dim):
    """x: (B, D_in).  param_slab: packed once by pack_params().  Returns (B, out_dim)."""
    batch = x.shape[0]
    vmem = pl.BlockSpec(memory_space=pltpu.MemorySpace.VMEM)
    y_t = pl.pallas_call(
        skipnet_kernel,
        out_shape=jax.ShapeDtypeStruct((out_dim, batch), jnp.float32),
        in_specs=[vmem, vmem],                                # x + one packed param slab
        out_specs=vmem,
    )(x.astype(jnp.float32), param_slab)
    # Kernel emits (out_dim, B) with batch on lanes; restore the module's (B, out_dim).
    return jnp.transpose(y_t)


def pack_params(params):
    """Pack all layer params into ONE f32 slab (done once at init, not per call).

    Slab shape (NUM_HIDDEN + 2, R, C), R = max(4, out_dim), C = max(D_in, 4) + 1:
      row 0          : [ W_in^T (4, D_in) | b_in column ]
      rows 1..99     : [ W_i^T  (4, 4)    | b_i  column ]   (hidden layer i-1)
      row 100        : [ W_out^T (out_dim, 4) | b_out column ]
    """
    (w_in, b_in, wh, bh, w_out, b_out) = params
    d_in = w_in.shape[0]
    out_dim = w_out.shape[1]
    rows = max(HIDDEN, out_dim)
    cols = max(d_in + 1, HIDDEN + 1)

    p = jnp.zeros((NUM_HIDDEN + 2, rows, cols), jnp.float32)
    p = p.at[0, :HIDDEN, :d_in].set(jnp.transpose(w_in).astype(jnp.float32))
    p = p.at[0, :HIDDEN, d_in].set(b_in.reshape(HIDDEN).astype(jnp.float32))

    wh_t = jnp.transpose(wh.astype(jnp.float32), (0, 2, 1))           # (99, j, k)
    p = p.at[1:NUM_HIDDEN + 1, :HIDDEN, :HIDDEN].set(wh_t)
    p = p.at[1:NUM_HIDDEN + 1, :HIDDEN, HIDDEN].set(
        bh.reshape(NUM_HIDDEN, HIDDEN).astype(jnp.float32))

    p = p.at[NUM_HIDDEN + 1, :out_dim, :HIDDEN].set(
        jnp.transpose(w_out).astype(jnp.float32))
    p = p.at[NUM_HIDDEN + 1, :out_dim, HIDDEN].set(
        b_out.reshape(out_dim).astype(jnp.float32))
    return p


def init_params(key, input_dim, output_dim):
    """Deterministic uniform init (PyTorch nn.Linear style, scaled by 0.5 so the
    99-layer skip stack stays in a comfortable f32 range for the demo)."""
    ks = jax.random.split(key, 6)

    def unif(k, shape, fan_in):
        bound = 0.5 / jnp.sqrt(float(fan_in))
        return jax.random.uniform(k, shape, jnp.float32, -bound, bound)

    w_in = unif(ks[0], (input_dim, HIDDEN), input_dim)
    b_in = unif(ks[1], (1, HIDDEN), input_dim)
    wh = unif(ks[2], (NUM_HIDDEN, HIDDEN, HIDDEN), HIDDEN)
    bh = unif(ks[3], (NUM_HIDDEN, 1, HIDDEN), HIDDEN)
    w_out = unif(ks[4], (HIDDEN, output_dim), HIDDEN)
    b_out = unif(ks[5], (1, output_dim), HIDDEN)
    return (w_in, b_in, wh, bh, w_out, b_out)


@jax.jit
def reference_forward(x, params):
    """Pure-JAX reference replicating the PyTorch forward exactly."""
    (w_in, b_in, wh, bh, w_out, b_out) = params
    hp = lax.Precision.HIGHEST
    out = jnp.maximum(jnp.dot(x, w_in, precision=hp) + b_in, 0.0)
    skip = out
    for i in range(NUM_HIDDEN):
        h = jnp.maximum(jnp.dot(out, wh[i], precision=hp) + bh[i], 0.0)
        if i % 5 and i != 0:
            out = h + skip
            skip = out
        else:
            out = h
    return jnp.dot(out, w_out, precision=hp) + b_out


if __name__ == "__main__":
    key = jax.random.PRNGKey(0)
    k_x, k_p = jax.random.split(key)

    batch, input_dim, output_dim = 8, 32, 2
    x = jax.random.normal(k_x, (batch, input_dim), jnp.float32)
    params = init_params(k_p, input_dim, output_dim)
    param_slab = pack_params(params)          # packed once (not per forward call)

    y = jax.block_until_ready(skip_connection_forward(x, param_slab, output_dim))
    y_ref = jax.block_until_ready(reference_forward(x, params))

    assert y.shape == (batch, output_dim)
    err = float(jnp.max(jnp.abs(y - y_ref)))
    scale = float(jnp.max(jnp.abs(y_ref)))
    assert err <= 2e-3 * max(scale, 1.0), (
        f"mismatch vs reference: err={err}, scale={scale}")

    print("KERNEL_OK")
</pallas_src>

<mosaic_0001>
module attributes {stable_mosaic.version = 11 : i64} {
  func.func @skipnet_kernel(%arg0: memref<8x32xf32, #tpu.memory_space<vmem>>, %arg1: memref<101x4x33xf32, #tpu.memory_space<vmem>>, %arg2: memref<2x8xf32, #tpu.memory_space<vmem>>) attributes {dimension_semantics = [], scalar_prefetch = 0 : i64, scratch_operands = 0 : i64, tpu.core_type = #tpu.core_type<tc>} {
    %c0 = arith.constant 0 : index
    %c0_0 = arith.constant 0 : index
    %0 = vector.load %arg0[%c0, %c0_0] : memref<8x32xf32, #tpu.memory_space<vmem>>, vector<8x32xf32>
    %c0_1 = arith.constant 0 : index
    %c0_2 = arith.constant 0 : index
    %c0_3 = arith.constant 0 : index
    %1 = vector.load %arg1[%c0_1, %c0_2, %c0_3] : memref<101x4x33xf32, #tpu.memory_space<vmem>>, vector<1x4x33xf32>
    %2 = vector.shape_cast %1 : vector<1x4x33xf32> to vector<4x33xf32>
    %3 = vector.extract_strided_slice %2 {offsets = [0, 0], sizes = [4, 32], strides = [1, 1]} : vector<4x33xf32> to vector<4x32xf32>
    %4 = vector.extract_strided_slice %2 {offsets = [0, 32], sizes = [4, 1], strides = [1, 1]} : vector<4x33xf32> to vector<4x1xf32>
    %5 = vector.shape_cast %3 : vector<4x32xf32> to vector<4x1x32xf32>
    %6 = vector.shape_cast %0 : vector<8x32xf32> to vector<1x8x32xf32>
    %7 = vector.broadcast %5 : vector<4x1x32xf32> to vector<4x8x32xf32>
    %8 = vector.broadcast %6 : vector<1x8x32xf32> to vector<4x8x32xf32>
    %9 = arith.mulf %7, %8 : vector<4x8x32xf32>
    %cst = arith.constant dense<0.000000e+00> : vector<4x8xf32>
    %10 = vector.multi_reduction <add>, %9, %cst [2] : vector<4x8x32xf32> to vector<4x8xf32>
    %11 = vector.broadcast %4 : vector<4x1xf32> to vector<4x8xf32>
    %12 = arith.addf %10, %11 : vector<4x8xf32>
    %cst_4 = arith.constant 0.000000e+00 : f32
    %13 = vector.broadcast %cst_4 : f32 to vector<4x8xf32>
    %14 = arith.maximumf %12, %13 : vector<4x8xf32>
    %c0_i32 = arith.constant 0 : i32
    %c19_i32 = arith.constant 19 : i32
    %15 = arith.addi %c0_i32, %c19_i32 : i32
    %c1_i32 = arith.constant 1 : i32
    %16:2 = scf.for %arg3 = %c0_i32 to %15 step %c1_i32 iter_args(%arg4 = %14, %arg5 = %14) -> (vector<4x8xf32>, vector<4x8xf32>)  : i32 {
      %c5_i32 = arith.constant 5 : i32
      %89 = arith.muli %arg3, %c5_i32 : i32
      %c1_i32_27 = arith.constant 1 : i32
      %90 = arith.addi %c1_i32_27, %89 : i32
      %91 = arith.index_cast %90 : i32 to index
      %c0_28 = arith.constant 0 : index
      %c0_29 = arith.constant 0 : index
      %92 = vector.load %arg1[%91, %c0_28, %c0_29] : memref<101x4x33xf32, #tpu.memory_space<vmem>>, vector<1x4x33xf32>
      %93 = vector.shape_cast %92 : vector<1x4x33xf32> to vector<4x33xf32>
      %94 = vector.extract_strided_slice %93 {offsets = [0, 0], sizes = [4, 4], strides = [1, 1]} : vector<4x33xf32> to vector<4x4xf32>
      %95 = vector.extract_strided_slice %93 {offsets = [0, 4], sizes = [4, 1], strides = [1, 1]} : vector<4x33xf32> to vector<4x1xf32>
      %96 = vector.shape_cast %94 : vector<4x4xf32> to vector<4x4x1xf32>
      %97 = vector.shape_cast %arg4 : vector<4x8xf32> to vector<1x4x8xf32>
      %98 = vector.broadcast %96 : vector<4x4x1xf32> to vector<4x4x8xf32>
      %99 = vector.broadcast %97 : vector<1x4x8xf32> to vector<4x4x8xf32>
      %100 = arith.mulf %98, %99 : vector<4x4x8xf32>
      %cst_30 = arith.constant dense<0.000000e+00> : vector<4x8xf32>
      %101 = vector.multi_reduction <add>, %100, %cst_30 [1] : vector<4x4x8xf32> to vector<4x8xf32>
      %102 = vector.broadcast %95 : vector<4x1xf32> to vector<4x8xf32>
      %103 = arith.addf %101, %102 : vector<4x8xf32>
      %cst_31 = arith.constant 0.000000e+00 : f32
      %104 = vector.broadcast %cst_31 : f32 to vector<4x8xf32>
      %105 = arith.maximumf %103, %104 : vector<4x8xf32>
      %c1_i32_32 = arith.constant 1 : i32
      %106 = arith.addi %90, %c1_i32_32 : i32
      %107 = arith.index_cast %106 : i32 to index
      %c0_33 = arith.constant 0 : index
      %c0_34 = arith.constant 0 : index
      %108 = vector.load %arg1[%107, %c0_33, %c0_34] : memref<101x4x33xf32, #tpu.memory_space<vmem>>, vector<1x4x33xf32>
      %109 = vector.shape_cast %108 : vector<1x4x33xf32> to vector<4x33xf32>
      %110 = vector.extract_strided_slice %109 {offsets = [0, 0], sizes = [4, 4], strides = [1, 1]} : vector<4x33xf32> to vector<4x4xf32>
      %111 = vector.extract_strided_slice %109 {offsets = [0, 4], sizes = [4, 1], strides = [1, 1]} : vector<4x33xf32> to vector<4x1xf32>
      %112 = vector.shape_cast %110 : vector<4x4xf32> to vector<4x4x1xf32>
      %113 = vector.shape_cast %105 : vector<4x8xf32> to vector<1x4x8xf32>
      %114 = vector.broadcast %112 : vector<4x4x1xf32> to vector<4x4x8xf32>
      %115 = vector.broadcast %113 : vector<1x4x8xf32> to vector<4x4x8xf32>
      %116 = arith.mulf %114, %115 : vector<4x4x8xf32>
      %cst_35 = arith.constant dense<0.000000e+00> : vector<4x8xf32>
      %117 = vector.multi_reduction <add>, %116, %cst_35 [1] : vector<4x4x8xf32> to vector<4x8xf32>
      %118 = vector.broadcast %111 : vector<4x1xf32> to vector<4x8xf32>
      %119 = arith.addf %117, %118 : vector<4x8xf32>
      %cst_36 = arith.constant 0.000000e+00 : f32
      %120 = vector.broadcast %cst_36 : f32 to vector<4x8xf32>
      %121 = arith.maximumf %119, %120 : vector<4x8xf32>
      %122 = arith.addf %121, %arg5 : vector<4x8xf32>
      %c2_i32 = arith.constant 2 : i32
      %123 = arith.addi %90, %c2_i32 : i32
      %124 = arith.index_cast %123 : i32 to index
      %c0_37 = arith.constant 0 : index
      %c0_38 = arith.constant 0 : index
      %125 = vector.load %arg1[%124, %c0_37, %c0_38] : memref<101x4x33xf32, #tpu.memory_space<vmem>>, vector<1x4x33xf32>
      %126 = vector.shape_cast %125 : vector<1x4x33xf32> to vector<4x33xf32>
      %127 = vector.extract_strided_slice %126 {offsets = [0, 0], sizes = [4, 4], strides = [1, 1]} : vector<4x33xf32> to vector<4x4xf32>
      %128 = vector.extract_strided_slice %126 {offsets = [0, 4], sizes = [4, 1], strides = [1, 1]} : vector<4x33xf32> to vector<4x1xf32>
      %129 = vector.shape_cast %127 : vector<4x4xf32> to vector<4x4x1xf32>
      %130 = vector.shape_cast %122 : vector<4x8xf32> to vector<1x4x8xf32>
      %131 = vector.broadcast %129 : vector<4x4x1xf32> to vector<4x4x8xf32>
      %132 = vector.broadcast %130 : vector<1x4x8xf32> to vector<4x4x8xf32>
      %133 = arith.mulf %131, %132 : vector<4x4x8xf32>
      %cst_39 = arith.constant dense<0.000000e+00> : vector<4x8xf32>
      %134 = vector.multi_reduction <add>, %133, %cst_39 [1] : vector<4x4x8xf32> to vector<4x8xf32>
      %135 = vector.broadcast %128 : vector<4x1xf32> to vector<4x8xf32>
      %136 = arith.addf %134, %135 : vector<4x8xf32>
      %cst_40 = arith.constant 0.000000e+00 : f32
      %137 = vector.broadcast %cst_40 : f32 to vector<4x8xf32>
      %138 = arith.maximumf %136, %137 : vector<4x8xf32>
      %139 = arith.addf %138, %122 : vector<4x8xf32>
      %c3_i32 = arith.constant 3 : i32
      %140 = arith.addi %90, %c3_i32 : i32
      %141 = arith.index_cast %140 : i32 to index
      %c0_41 = arith.constant 0 : index
      %c0_42 = arith.constant 0 : index
      %142 = vector.load %arg1[%141, %c0_41, %c0_42] : memref<101x4x33xf32, #tpu.memory_space<vmem>>, vector<1x4x33xf32>
      %143 = vector.shape_cast %142 : vector<1x4x33xf32> to vector<4x33xf32>
      %144 = vector.extract_strided_slice %143 {offsets = [0, 0], sizes = [4, 4], strides = [1, 1]} : vector<4x33xf32> to vector<4x4xf32>
      %145 = vector.extract_strided_slice %143 {offsets = [0, 4], sizes = [4, 1], strides = [1, 1]} : vector<4x33xf32> to vector<4x1xf32>
      %146 = vector.shape_cast %144 : vector<4x4xf32> to vector<4x4x1xf32>
      %147 = vector.shape_cast %139 : vector<4x8xf32> to vector<1x4x8xf32>
      %148 = vector.broadcast %146 : vector<4x4x1xf32> to vector<4x4x8xf32>
      %149 = vector.broadcast %147 : vector<1x4x8xf32> to vector<4x4x8xf32>
      %150 = arith.mulf %148, %149 : vector<4x4x8xf32>
      %cst_43 = arith.constant dense<0.000000e+00> : vector<4x8xf32>
      %151 = vector.multi_reduction <add>, %150, %cst_43 [1] : vector<4x4x8xf32> to vector<4x8xf32>
      %152 = vector.broadcast %145 : vector<4x1xf32> to vector<4x8xf32>
      %153 = arith.addf %151, %152 : vector<4x8xf32>
      %cst_44 = arith.constant 0.000000e+00 : f32
      %154 = vector.broadcast %cst_44 : f32 to vector<4x8xf32>
      %155 = arith.maximumf %153, %154 : vector<4x8xf32>
      %156 = arith.addf %155, %139 : vector<4x8xf32>
      %c4_i32 = arith.constant 4 : i32
      %157 = arith.addi %90, %c4_i32 : i32
      %158 = arith.index_cast %157 : i32 to index
      %c0_45 = arith.constant 0 : index
      %c0_46 = arith.constant 0 : index
      %159 = vector.load %arg1[%158, %c0_45, %c0_46] : memref<101x4x33xf32, #tpu.memory_space<vmem>>, vector<1x4x33xf32>
      %160 = vector.shape_cast %159 : vector<1x4x33xf32> to vector<4x33xf32>
      %161 = vector.extract_strided_slice %160 {offsets = [0, 0], sizes = [4, 4], strides = [1, 1]} : vector<4x33xf32> to vector<4x4xf32>
      %162 = vector.extract_strided_slice %160 {offsets = [0, 4], sizes = [4, 1], strides = [1, 1]} : vector<4x33xf32> to vector<4x1xf32>
      %163 = vector.shape_cast %161 : vector<4x4xf32> to vector<4x4x1xf32>
      %164 = vector.shape_cast %156 : vector<4x8xf32> to vector<1x4x8xf32>
      %165 = vector.broadcast %163 : vector<4x4x1xf32> to vector<4x4x8xf32>
      %166 = vector.broadcast %164 : vector<1x4x8xf32> to vector<4x4x8xf32>
      %167 = arith.mulf %165, %166 : vector<4x4x8xf32>
      %cst_47 = arith.constant dense<0.000000e+00> : vector<4x8xf32>
      %168 = vector.multi_reduction <add>, %167, %cst_47 [1] : vector<4x4x8xf32> to vector<4x8xf32>
      %169 = vector.broadcast %162 : vector<4x1xf32> to vector<4x8xf32>
      %170 = arith.addf %168, %169 : vector<4x8xf32>
      %cst_48 = arith.constant 0.000000e+00 : f32
      %171 = vector.broadcast %cst_48 : f32 to vector<4x8xf32>
      %172 = arith.maximumf %170, %171 : vector<4x8xf32>
      %173 = arith.addf %172, %156 : vector<4x8xf32>
      scf.yield %173, %173 : vector<4x8xf32>, vector<4x8xf32>
    }
    %c19_i32_5 = arith.constant 19 : i32
    %c96 = arith.constant 96 : index
    %c0_6 = arith.constant 0 : index
    %c0_7 = arith.constant 0 : index
    %17 = vector.load %arg1[%c96, %c0_6, %c0_7] : memref<101x4x33xf32, #tpu.memory_space<vmem>>, vector<1x4x33xf32>
    %18 = vector.shape_cast %17 : vector<1x4x33xf32> to vector<4x33xf32>
    %19 = vector.extract_strided_slice %18 {offsets = [0, 0], sizes = [4, 4], strides = [1, 1]} : vector<4x33xf32> to vector<4x4xf32>
    %20 = vector.extract_strided_slice %18 {offsets = [0, 4], sizes = [4, 1], strides = [1, 1]} : vector<4x33xf32> to vector<4x1xf32>
    %21 = vector.shape_cast %19 : vector<4x4xf32> to vector<4x4x1xf32>
    %22 = vector.shape_cast %16#0 : vector<4x8xf32> to vector<1x4x8xf32>
    %23 = vector.broadcast %21 : vector<4x4x1xf32> to vector<4x4x8xf32>
    %24 = vector.broadcast %22 : vector<1x4x8xf32> to vector<4x4x8xf32>
    %25 = arith.mulf %23, %24 : vector<4x4x8xf32>
    %cst_8 = arith.constant dense<0.000000e+00> : vector<4x8xf32>
    %26 = vector.multi_reduction <add>, %25, %cst_8 [1] : vector<4x4x8xf32> to vector<4x8xf32>
    %27 = vector.broadcast %20 : vector<4x1xf32> to vector<4x8xf32>
    %28 = arith.addf %26, %27 : vector<4x8xf32>
    %cst_9 = arith.constant 0.000000e+00 : f32
    %29 = vector.broadcast %cst_9 : f32 to vector<4x8xf32>
    %30 = arith.maximumf %28, %29 : vector<4x8xf32>
    %c97 = arith.constant 97 : index
    %c0_10 = arith.constant 0 : index
    %c0_11 = arith.constant 0 : index
    %31 = vector.load %arg1[%c97, %c0_10, %c0_11] : memref<101x4x33xf32, #tpu.memory_space<vmem>>, vector<1x4x33xf32>
    %32 = vector.shape_cast %31 : vector<1x4x33xf32> to vector<4x33xf32>
    %33 = vector.extract_strided_slice %32 {offsets = [0, 0], sizes = [4, 4], strides = [1, 1]} : vector<4x33xf32> to vector<4x4xf32>
    %34 = vector.extract_strided_slice %32 {offsets = [0, 4], sizes = [4, 1], strides = [1, 1]} : vector<4x33xf32> to vector<4x1xf32>
    %35 = vector.shape_cast %33 : vector<4x4xf32> to vector<4x4x1xf32>
    %36 = vector.shape_cast %30 : vector<4x8xf32> to vector<1x4x8xf32>
    %37 = vector.broadcast %35 : vector<4x4x1xf32> to vector<4x4x8xf32>
    %38 = vector.broadcast %36 : vector<1x4x8xf32> to vector<4x4x8xf32>
    %39 = arith.mulf %37, %38 : vector<4x4x8xf32>
    %cst_12 = arith.constant dense<0.000000e+00> : vector<4x8xf32>
    %40 = vector.multi_reduction <add>, %39, %cst_12 [1] : vector<4x4x8xf32> to vector<4x8xf32>
    %41 = vector.broadcast %34 : vector<4x1xf32> to vector<4x8xf32>
    %42 = arith.addf %40, %41 : vector<4x8xf32>
    %cst_13 = arith.constant 0.000000e+00 : f32
    %43 = vector.broadcast %cst_13 : f32 to vector<4x8xf32>
    %44 = arith.maximumf %42, %43 : vector<4x8xf32>
    %45 = arith.addf %44, %16#1 : vector<4x8xf32>
    %c98 = arith.constant 98 : index
    %c0_14 = arith.constant 0 : index
    %c0_15 = arith.constant 0 : index
    %46 = vector.load %arg1[%c98, %c0_14, %c0_15] : memref<101x4x33xf32, #tpu.memory_space<vmem>>, vector<1x4x33xf32>
    %47 = vector.shape_cast %46 : vector<1x4x33xf32> to vector<4x33xf32>
    %48 = vector.extract_strided_slice %47 {offsets = [0, 0], sizes = [4, 4], strides = [1, 1]} : vector<4x33xf32> to vector<4x4xf32>
    %49 = vector.extract_strided_slice %47 {offsets = [0, 4], sizes = [4, 1], strides = [1, 1]} : vector<4x33xf32> to vector<4x1xf32>
    %50 = vector.shape_cast %48 : vector<4x4xf32> to vector<4x4x1xf32>
    %51 = vector.shape_cast %45 : vector<4x8xf32> to vector<1x4x8xf32>
    %52 = vector.broadcast %50 : vector<4x4x1xf32> to vector<4x4x8xf32>
    %53 = vector.broadcast %51 : vector<1x4x8xf32> to vector<4x4x8xf32>
    %54 = arith.mulf %52, %53 : vector<4x4x8xf32>
    %cst_16 = arith.constant dense<0.000000e+00> : vector<4x8xf32>
    %55 = vector.multi_reduction <add>, %54, %cst_16 [1] : vector<4x4x8xf32> to vector<4x8xf32>
    %56 = vector.broadcast %49 : vector<4x1xf32> to vector<4x8xf32>
    %57 = arith.addf %55, %56 : vector<4x8xf32>
    %cst_17 = arith.constant 0.000000e+00 : f32
    %58 = vector.broadcast %cst_17 : f32 to vector<4x8xf32>
    %59 = arith.maximumf %57, %58 : vector<4x8xf32>
    %60 = arith.addf %59, %45 : vector<4x8xf32>
    %c99 = arith.constant 99 : index
    %c0_18 = arith.constant 0 : index
    %c0_19 = arith.constant 0 : index
    %61 = vector.load %arg1[%c99, %c0_18, %c0_19] : memref<101x4x33xf32, #tpu.memory_space<vmem>>, vector<1x4x33xf32>
    %62 = vector.shape_cast %61 : vector<1x4x33xf32> to vector<4x33xf32>
    %63 = vector.extract_strided_slice %62 {offsets = [0, 0], sizes = [4, 4], strides = [1, 1]} : vector<4x33xf32> to vector<4x4xf32>
    %64 = vector.extract_strided_slice %62 {offsets = [0, 4], sizes = [4, 1], strides = [1, 1]} : vector<4x33xf32> to vector<4x1xf32>
    %65 = vector.shape_cast %63 : vector<4x4xf32> to vector<4x4x1xf32>
    %66 = vector.shape_cast %60 : vector<4x8xf32> to vector<1x4x8xf32>
    %67 = vector.broadcast %65 : vector<4x4x1xf32> to vector<4x4x8xf32>
    %68 = vector.broadcast %66 : vector<1x4x8xf32> to vector<4x4x8xf32>
    %69 = arith.mulf %67, %68 : vector<4x4x8xf32>
    %cst_20 = arith.constant dense<0.000000e+00> : vector<4x8xf32>
    %70 = vector.multi_reduction <add>, %69, %cst_20 [1] : vector<4x4x8xf32> to vector<4x8xf32>
    %71 = vector.broadcast %64 : vector<4x1xf32> to vector<4x8xf32>
    %72 = arith.addf %70, %71 : vector<4x8xf32>
    %cst_21 = arith.constant 0.000000e+00 : f32
    %73 = vector.broadcast %cst_21 : f32 to vector<4x8xf32>
    %74 = arith.maximumf %72, %73 : vector<4x8xf32>
    %75 = arith.addf %74, %60 : vector<4x8xf32>
    %c100 = arith.constant 100 : index
    %c0_22 = arith.constant 0 : index
    %c0_23 = arith.constant 0 : index
    %76 = vector.load %arg1[%c100, %c0_22, %c0_23] : memref<101x4x33xf32, #tpu.memory_space<vmem>>, vector<1x4x33xf32>
    %77 = vector.shape_cast %76 : vector<1x4x33xf32> to vector<4x33xf32>
    %78 = vector.extract_strided_slice %77 {offsets = [0, 0], sizes = [2, 4], strides = [1, 1]} : vector<4x33xf32> to vector<2x4xf32>
    %79 = vector.extract_strided_slice %77 {offsets = [0, 4], sizes = [2, 1], strides = [1, 1]} : vector<4x33xf32> to vector<2x1xf32>
    %80 = vector.shape_cast %78 : vector<2x4xf32> to vector<2x4x1xf32>
    %81 = vector.shape_cast %75 : vector<4x8xf32> to vector<1x4x8xf32>
    %82 = vector.broadcast %80 : vector<2x4x1xf32> to vector<2x4x8xf32>
    %83 = vector.broadcast %81 : vector<1x4x8xf32> to vector<2x4x8xf32>
    %84 = arith.mulf %82, %83 : vector<2x4x8xf32>
    %cst_24 = arith.constant dense<0.000000e+00> : vector<2x8xf32>
    %85 = vector.multi_reduction <add>, %84, %cst_24 [1] : vector<2x4x8xf32> to vector<2x8xf32>
    %86 = vector.broadcast %79 : vector<2x1xf32> to vector<2x8xf32>
    %87 = arith.addf %85, %86 : vector<2x8xf32>
    %c0_25 = arith.constant 0 : index
    %c0_26 = arith.constant 0 : index
    %88 = vector.load %arg2[%c0_25, %c0_26] : memref<2x8xf32, #tpu.memory_space<vmem>>, vector<2x8xf32>
    tpu.vector_store %arg2[%c0_25, %c0_26], %87 {strides = array<i32>} : memref<2x8xf32, #tpu.memory_space<vmem>>, vector<2x8xf32>,
    return
  }
}

</mosaic_0001>

<llo_original>
// kernel: skip_connection_forward.1
$region0: #{skip_connection_forward.1}
  #allocation0 [shape = 'u32[]', space=smem, size = 0x4, offset = 0x4, fixed_abs, tag = 'smem constant byte address 0x4 - core index']
  #allocation1 [shape = 'u32[144,128]{1,0:T(1,128)}', space=vmem, size = 0x12000, scoped, tag = 'internal scratch']
  %s0 = inlined_call_operand.vmem [shape: f32[8,32], index: 0, kind: input, shape index: {}]
  %s1 = inlined_call_operand.vmem [shape: f32[101,4,33], index: 1, kind: input, shape index: {}]
  %s2 = inlined_call_operand.hbm [shape: f32[2,8], index: 2, kind: output, shape index: {}]
  %s3 = sld [smem:[#allocation0]]
  $region25: #{skip_connection_forward.1} parent=0
    _
  %s5 = ssub.s32 1, %s3
  %s6 = scalar_select 0, %s5, %s3
  $region1: #{skip_connection_forward.1} parent=0
    #allocation2 [shape = 'u8[1024]{0}', space=vmem, size = 0x400, scoped, tag = 'output window, operand 0, single buffered']
    #allocation3 [shape = 's32[1]{0}', space=sflag, size = 0x4, scoped, tag = 'scoped memory for skip_connection_forward.1']
    %7 = vsyncpa [#allocation3], 0
    // Predicated region
    $region2: #{skip_connection_forward.1} parent=1 // pred_check
      _
    $region3: #{skip_connection_forward.1} parent=1 // pred_check_branch
      %9 = sbr.rel (0) target = $region5
    $region4: #{skip_connection_forward.1} parent=1 // pred_region
      _
    $region5: #{skip_connection_forward.1} parent=1 // pred_fallthru
      _
    // Predicated region
    $region6: #{skip_connection_forward.1} parent=1 // pred_check
      _
    $region7: #{skip_connection_forward.1} parent=1 // pred_check_branch
      %11 = sbr.rel (0) target = $region9
    $region8: #{skip_connection_forward.1} parent=1 // pred_region
      _
    $region9: #{skip_connection_forward.1} parent=1 // pred_fallthru
      _
    %v12 = vld [vmem:[%s0] sm:$0xff]
    %v13 = vld [vmem:[%s1] sm:$0xf]
    %v16 = vunpack.c.l.s4 1966171168
    %v17 = vunpack.c.0.s8 %v16
    %v18 = vlaneseq
    %v19 = vshrl.u32 %v18, 7
    %v20 = vsub.s32 %v17, %v19
    %v21 = vrot.slane %v13, %v20
    %v22 = vcombine.high %v21, %v21
    %v24 = vunpack.c.l.s4 1966171168
    %v25 = vunpack.c.0.s8 %v24
    %v26 = vlaneseq
    %v27 = vshrl.u32 %v26, 7
    %v28 = vsub.s32 %v25, %v27
    %v29 = vrot.slane %v21, %v28
    %v31 = vunpack.c.l.s4 1966171168
    %v32 = vunpack.c.0.s8 %v31
    %v33 = vlaneseq
    %v34 = vshrl.u32 %v33, 7
    %v35 = vsub.s32 %v32, %v34
    %v36 = vrot.slane %v22, %v35
    %v37 = vcombine.high %v29, %v29
    %v38 = vcombine.high %v36, %v36
    %v39 = vlaneseq
    %v40 = vshrl.u32 %v39, 7
    %v41 = vsub.s32 0, %v40
    %v42 = vrot.slane %v29, %v41
    %v43 = vlaneseq
    %v44 = vshrl.u32 %v43, 7
    %v45 = vsub.s32 0, %v44
    %v46 = vrot.slane %v36, %v45
    %v47 = vlaneseq
    %v48 = vshrl.u32 %v47, 7
    %v49 = vsub.s32 0, %v48
    %v50 = vrot.slane %v37, %v49
    %v51 = vlaneseq
    %v52 = vshrl.u32 %v51, 7
    %v53 = vsub.s32 0, %v52
    %v54 = vrot.slane %v38, %v53
    %v59 = vmul.f32 %v42, %v12
    %v60 = vmul.f32 %v46, %v12
    %v61 = vmul.f32 %v50, %v12
    %v62 = vmul.f32 %v54, %v12
    %vm63 = vcmask 261120
    %v64 = vsel %vm63, %v59, 0.0
    %65 = vadd.xlane.f32.xlu0 %v64
    %v66 = vpop.xlane.xlu0 %65
    %v67 = vsel %vm63, %v60, 0.0
    %68 = vadd.xlane.f32.xlu0 %v67
    %v69 = vpop.xlane.xlu0 %68
    %v70 = vsel %vm63, %v61, 0.0
    %71 = vadd.xlane.f32.xlu0 %v70
    %v72 = vpop.xlane.xlu0 %71
    %v73 = vsel %vm63, %v62, 0.0
    %74 = vadd.xlane.f32.xlu0 %v73
    %v75 = vpop.xlane.xlu0 %74
    %76 = vset.pattern.permute.xlu0 32
    %77 = vperm.xlu0 %76, %v13
    %v78 = vpop.permute.xlu0 %77
    %v79 = vlaneseq
    %v80 = vshrl.u32 %v79, 7
    %v81 = vsub.s32 0, %v80
    %v82 = vrot.slane %v78, %v81
    %v83 = vlaneseq
    %v84 = vshrl.u32 %v83, 7
    %v85 = vsub.s32 1, %v84
    %v86 = vrot.slane %v78, %v85
    %v87 = vlaneseq
    %v88 = vshrl.u32 %v87, 7
    %v89 = vsub.s32 2, %v88
    %v90 = vrot.slane %v78, %v89
    %v91 = vlaneseq
    %v92 = vshrl.u32 %v91, 7
    %v93 = vsub.s32 3, %v92
    %v94 = vrot.slane %v78, %v93
    %v99 = vadd.f32 %v66, %v82
    %v100 = vadd.f32 %v69, %v86
    %v101 = vadd.f32 %v72, %v90
    %v102 = vadd.f32 %v75, %v94
    %v103 = vmax.f32 %v99, 0.0
    %v104 = vmax.f32 %v100, 0.0
    %v105 = vmax.f32 %v101, 0.0
    %v106 = vmax.f32 %v102, 0.0
    %111 = vset.pattern.permute.xlu0 0
    %112 = vperm.xlu0 %111, %v103
    %v113 = vpop.permute.xlu0 %112
    %114 = vset.pattern.permute.xlu0 0
    %115 = vperm.xlu0 %114, %v104
    %v116 = vpop.permute.xlu0 %115
    %117 = vset.pattern.permute.xlu0 0
    %118 = vperm.xlu0 %117, %v105
    %v119 = vpop.permute.xlu0 %118
    %120 = vset.pattern.permute.xlu0 0
    %121 = vperm.xlu0 %120, %v106
    %v122 = vpop.permute.xlu0 %121
    %v123 = vlaneseq
    %v124 = vand.u32 %v123, 127
    %v125 = vlaneseq
    %v126 = vshrl.u32 %v125, 7
    %v127 = vsub.s32 %v124, %v126
    %v128 = vrot.slane %v113, %v127
    %v129 = vlaneseq
    %v130 = vshrl.u32 %v129, 7
    %v131 = vsub.s32 %v124, %v130
    %v132 = vrot.slane %v116, %v131
    %v133 = vlaneseq
    %v134 = vshrl.u32 %v133, 7
    %v135 = vsub.s32 %v124, %v134
    %v136 = vrot.slane %v119, %v135
    %v137 = vlaneseq
    %v138 = vshrl.u32 %v137, 7
    %v139 = vsub.s32 %v124, %v138
    %v140 = vrot.slane %v122, %v139
    %vm141 = vcmask 1041409
    %v142 = vsel %vm141, %v132, %v128
    %vm143 = vcmask 1042434
    %v144 = vsel %vm143, %v136, %v142
    %vm145 = vcmask 1043459
    %v146 = vsel %vm145, %v140, %v144
    loop: start=0, step=1, limit=19
    $region10: #{skip_connection_forward.1} parent=1 // loop_pre_header
      _
    $region11: #{skip_connection_forward.1} parent=1 // loop_header
      %s149 = sphi 0, %s153
      %p150 = scmp.ge.s32.totalorder %s149, 19
      %v154 = vphi %v146, %v649
    $region12: #{skip_connection_forward.1} parent=1 // loop_header_branch
      %152 = sbr.rel (%p150) target = $region16
    $region13: #{skip_connection_forward.1} parent=1 // loop_body
      %s155 = smul.u32 %s149, 5
      %s156 = sadd.s32 %s155, 1
      %s157 = smul.u32 %s156, 4
      %s158 = scalar_lea.vmem %s1, %s157
      %v159 = vld [vmem:[%s158] sm:$0xf]
      %v160 = vlaneseq
      %v161 = vshrl.u32 %v160, 7
      %v162 = vsub.s32 0, %v161
      %v163 = vrot.slane %v159, %v162
      %165 = vbcast.lane.b32.xlu0 %v163, 256
      %v166 = vpop.permute.xlu0 %165
      %v167 = vlaneseq
      %v168 = vshrl.u32 %v167, 7
      %v169 = vsub.s32 1, %v168
      %v170 = vrot.slane %v159, %v169
      %172 = vbcast.lane.b32.xlu0 %v170, 256
      %v173 = vpop.permute.xlu0 %172
      %v174 = vlaneseq
      %v175 = vshrl.u32 %v174, 7
      %v176 = vsub.s32 2, %v175
      %v177 = vrot.slane %v159, %v176
      %179 = vbcast.lane.b32.xlu0 %v177, 256
      %v180 = vpop.permute.xlu0 %179
      %v181 = vlaneseq
      %v182 = vshrl.u32 %v181, 7
      %v183 = vsub.s32 3, %v182
      %v184 = vrot.slane %v159, %v183
      %186 = vbcast.lane.b32.xlu0 %v184, 256
      %v187 = vpop.permute.xlu0 %186
      %v188 = vmul.f32 %v166, %v154
      %v189 = vmul.f32 %v173, %v154
      %v190 = vmul.f32 %v180, %v154
      %v191 = vmul.f32 %v187, %v154
      %vm192 = vcmask 60416
      %v193 = vsel %vm192, %v188, 0.0
      %v194 = vrot.slane %v193, 4
      %v195 = vadd.f32 %v193, %v194
      %v196 = vrot.slane %v195, 2
      %v197 = vadd.f32 %v195, %v196
      %v198 = vrot.slane %v197, 1
      %v199 = vadd.f32 %v197, %v198
      %v200 = vsel %vm192, %v189, 0.0
      %v201 = vrot.slane %v200, 4
      %v202 = vadd.f32 %v200, %v201
      %v203 = vrot.slane %v202, 2
      %v204 = vadd.f32 %v202, %v203
      %v205 = vrot.slane %v204, 1
      %v206 = vadd.f32 %v204, %v205
      %v207 = vsel %vm192, %v190, 0.0
      %v208 = vrot.slane %v207, 4
      %v209 = vadd.f32 %v207, %v208
      %v210 = vrot.slane %v209, 2
      %v211 = vadd.f32 %v209, %v210
      %v212 = vrot.slane %v211, 1
      %v213 = vadd.f32 %v211, %v212
      %v214 = vsel %vm192, %v191, 0.0
      %v215 = vrot.slane %v214, 4
      %v216 = vadd.f32 %v214, %v215
      %v217 = vrot.slane %v216, 2
      %v218 = vadd.f32 %v216, %v217
      %v219 = vrot.slane %v218, 1
      %v220 = vadd.f32 %v218, %v219
      %222 = vset.pattern.permute.xlu0 4
      %223 = vperm.xlu0 %222, %v159
      %v224 = vpop.permute.xlu0 %223
      %v225 = vrot.slane %v224, 1
      %v226 = vrot.slane %v224, 2
      %v227 = vrot.slane %v224, 3
      %v232 = vadd.f32 %v199, %v224
      %v233 = vadd.f32 %v206, %v225
      %v234 = vadd.f32 %v213, %v226
      %v235 = vadd.f32 %v220, %v227
      %v236 = vmax.f32 %v232, 0.0
      %v237 = vmax.f32 %v233, 0.0
      %v238 = vmax.f32 %v234, 0.0
      %v239 = vmax.f32 %v235, 0.0
      %s240 = sadd.s32 %s155, 2
      %s241 = smul.u32 %s240, 4
      %s242 = scalar_lea.vmem %s1, %s241
      %v243 = vld [vmem:[%s242] sm:$0xf]
      %v244 = vlaneseq
      %v245 = vshrl.u32 %v244, 7
      %v246 = vsub.s32 0, %v245
      %v247 = vrot.slane %v243, %v246
      %249 = vbcast.lane.b32.xlu0 %v247, 256
      %v250 = vpop.permute.xlu0 %249
      %v251 = vlaneseq
      %v252 = vshrl.u32 %v251, 7
      %v253 = vsub.s32 1, %v252
      %v254 = vrot.slane %v243, %v253
      %256 = vbcast.lane.b32.xlu0 %v254, 256
      %v257 = vpop.permute.xlu0 %256
      %v258 = vlaneseq
      %v259 = vshrl.u32 %v258, 7
      %v260 = vsub.s32 2, %v259
      %v261 = vrot.slane %v243, %v260
      %263 = vbcast.lane.b32.xlu0 %v261, 256
      %v264 = vpop.permute.xlu0 %263
      %v265 = vlaneseq
      %v266 = vshrl.u32 %v265, 7
      %v267 = vsub.s32 3, %v266
      %v268 = vrot.slane %v243, %v267
      %270 = vbcast.lane.b32.xlu0 %v268, 256
      %v271 = vpop.permute.xlu0 %270
      %v276 = vrot.slane %v237, 7
      %v277 = vsel %vm141, %v276, %v236
      %v278 = vrot.slane %v238, 6
      %v279 = vsel %vm143, %v278, %v277
      %v280 = vrot.slane %v239, 5
      %v281 = vsel %vm145, %v280, %v279
      %v283 = vmul.f32 %v250, %v281
      %v284 = vmul.f32 %v257, %v281
      %v285 = vmul.f32 %v264, %v281
      %v286 = vmul.f32 %v271, %v281
      %v287 = vsel %vm192, %v283, 0.0
      %v288 = vrot.slane %v287, 4
      %v289 = vadd.f32 %v287, %v288
      %v290 = vrot.slane %v289, 2
      %v291 = vadd.f32 %v289, %v290
      %v292 = vrot.slane %v291, 1
      %v293 = vadd.f32 %v291, %v292
      %v294 = vsel %vm192, %v284, 0.0
      %v295 = vrot.slane %v294, 4
      %v296 = vadd.f32 %v294, %v295
      %v297 = vrot.slane %v296, 2
      %v298 = vadd.f32 %v296, %v297
      %v299 = vrot.slane %v298, 1
      %v300 = vadd.f32 %v298, %v299
      %v301 = vsel %vm192, %v285, 0.0
      %v302 = vrot.slane %v301, 4
      %v303 = vadd.f32 %v301, %v302
      %v304 = vrot.slane %v303, 2
      %v305 = vadd.f32 %v303, %v304
      %v306 = vrot.slane %v305, 1
      %v307 = vadd.f32 %v305, %v306
      %v308 = vsel %vm192, %v286, 0.0
      %v309 = vrot.slane %v308, 4
      %v310 = vadd.f32 %v308, %v309
      %v311 = vrot.slane %v310, 2
      %v312 = vadd.f32 %v310, %v311
      %v313 = vrot.slane %v312, 1
      %v314 = vadd.f32 %v312, %v313
      %316 = vset.pattern.permute.xlu0 4
      %317 = vperm.xlu0 %316, %v243
      %v318 = vpop.permute.xlu0 %317
      %v319 = vrot.slane %v318, 1
      %v320 = vrot.slane %v318, 2
      %v321 = vrot.slane %v318, 3
      %v326 = vadd.f32 %v293, %v318
      %v327 = vadd.f32 %v300, %v319
      %v328 = vadd.f32 %v307, %v320
      %v329 = vadd.f32 %v314, %v321
      %v330 = vmax.f32 %v326, 0.0
      %v331 = vmax.f32 %v327, 0.0
      %v332 = vmax.f32 %v328, 0.0
      %v333 = vmax.f32 %v329, 0.0
      %v335 = vrot.slane %v154, 1
      %v336 = vrot.slane %v154, 2
      %v337 = vrot.slane %v154, 3
      %v342 = vadd.f32 %v330, %v154
      %v343 = vadd.f32 %v331, %v335
      %v344 = vadd.f32 %v332, %v336
      %v345 = vadd.f32 %v333, %v337
      %s346 = sadd.s32 %s155, 3
      %s347 = smul.u32 %s346, 4
      %s348 = scalar_lea.vmem %s1, %s347
      %v349 = vld [vmem:[%s348] sm:$0xf]
      %v350 = vlaneseq
      %v351 = vshrl.u32 %v350, 7
      %v352 = vsub.s32 0, %v351
      %v353 = vrot.slane %v349, %v352
      %355 = vbcast.lane.b32.xlu0 %v353, 256
      %v356 = vpop.permute.xlu0 %355
      %v357 = vlaneseq
      %v358 = vshrl.u32 %v357, 7
      %v359 = vsub.s32 1, %v358
      %v360 = vrot.slane %v349, %v359
      %362 = vbcast.lane.b32.xlu0 %v360, 256
      %v363 = vpop.permute.xlu0 %362
      %v364 = vlaneseq
      %v365 = vshrl.u32 %v364, 7
      %v366 = vsub.s32 2, %v365
      %v367 = vrot.slane %v349, %v366
      %369 = vbcast.lane.b32.xlu0 %v367, 256
      %v370 = vpop.permute.xlu0 %369
      %v371 = vlaneseq
      %v372 = vshrl.u32 %v371, 7
      %v373 = vsub.s32 3, %v372
      %v374 = vrot.slane %v349, %v373
      %376 = vbcast.lane.b32.xlu0 %v374, 256
      %v377 = vpop.permute.xlu0 %376
      %v382 = vrot.slane %v343, 7
      %v383 = vsel %vm141, %v382, %v342
      %v384 = vrot.slane %v344, 6
      %v385 = vsel %vm143, %v384, %v383
      %v386 = vrot.slane %v345, 5
      %v387 = vsel %vm145, %v386, %v385
      %v389 = vmul.f32 %v356, %v387
      %v390 = vmul.f32 %v363, %v387
      %v391 = vmul.f32 %v370, %v387
      %v392 = vmul.f32 %v377, %v387
      %v393 = vsel %vm192, %v389, 0.0
      %v394 = vrot.slane %v393, 4
      %v395 = vadd.f32 %v393, %v394
      %v396 = vrot.slane %v395, 2
      %v397 = vadd.f32 %v395, %v396
      %v398 = vrot.slane %v397, 1
      %v399 = vadd.f32 %v397, %v398
      %v400 = vsel %vm192, %v390, 0.0
      %v401 = vrot.slane %v400, 4
      %v402 = vadd.f32 %v400, %v401
      %v403 = vrot.slane %v402, 2
      %v404 = vadd.f32 %v402, %v403
      %v405 = vrot.slane %v404, 1
      %v406 = vadd.f32 %v404, %v405
      %v407 = vsel %vm192, %v391, 0.0
      %v408 = vrot.slane %v407, 4
      %v409 = vadd.f32 %v407, %v408
      %v410 = vrot.slane %v409, 2
      %v411 = vadd.f32 %v409, %v410
      %v412 = vrot.slane %v411, 1
      %v413 = vadd.f32 %v411, %v412
      %v414 = vsel %vm192, %v392, 0.0
      %v415 = vrot.slane %v414, 4
      %v416 = vadd.f32 %v414, %v415
      %v417 = vrot.slane %v416, 2
      %v418 = vadd.f32 %v416, %v417
      %v419 = vrot.slane %v418, 1
      %v420 = vadd.f32 %v418, %v419
      %422 = vset.pattern.permute.xlu0 4
      %423 = vperm.xlu0 %422, %v349
      %v424 = vpop.permute.xlu0 %423
      %v425 = vrot.slane %v424, 1
      %v426 = vrot.slane %v424, 2
      %v427 = vrot.slane %v424, 3
      %v432 = vadd.f32 %v399, %v424
      %v433 = vadd.f32 %v406, %v425
      %v434 = vadd.f32 %v413, %v426
      %v435 = vadd.f32 %v420, %v427
      %v436 = vmax.f32 %v432, 0.0
      %v437 = vmax.f32 %v433, 0.0
      %v438 = vmax.f32 %v434, 0.0
      %v439 = vmax.f32 %v435, 0.0
      %v440 = vadd.f32 %v436, %v342
      %v441 = vadd.f32 %v437, %v343
      %v442 = vadd.f32 %v438, %v344
      %v443 = vadd.f32 %v439, %v345
      %s444 = sadd.s32 %s155, 4
      %s445 = smul.u32 %s444, 4
      %s446 = scalar_lea.vmem %s1, %s445
      %v447 = vld [vmem:[%s446] sm:$0xf]
      %v448 = vlaneseq
      %v449 = vshrl.u32 %v448, 7
      %v450 = vsub.s32 0, %v449
      %v451 = vrot.slane %v447, %v450
      %453 = vbcast.lane.b32.xlu0 %v451, 256
      %v454 = vpop.permute.xlu0 %453
      %v455 = vlaneseq
      %v456 = vshrl.u32 %v455, 7
      %v457 = vsub.s32 1, %v456
      %v458 = vrot.slane %v447, %v457
      %460 = vbcast.lane.b32.xlu0 %v458, 256
      %v461 = vpop.permute.xlu0 %460
      %v462 = vlaneseq
      %v463 = vshrl.u32 %v462, 7
      %v464 = vsub.s32 2, %v463
      %v465 = vrot.slane %v447, %v464
      %467 = vbcast.lane.b32.xlu0 %v465, 256
      %v468 = vpop.permute.xlu0 %467
      %v469 = vlaneseq
      %v470 = vshrl.u32 %v469, 7
      %v471 = vsub.s32 3, %v470
      %v472 = vrot.slane %v447, %v471
      %474 = vbcast.lane.b32.xlu0 %v472, 256
      %v475 = vpop.permute.xlu0 %474
      %v480 = vrot.slane %v441, 7
      %v481 = vsel %vm141, %v480, %v440
      %v482 = vrot.slane %v442, 6
      %v483 = vsel %vm143, %v482, %v481
      %v484 = vrot.slane %v443, 5
      %v485 = vsel %vm145, %v484, %v483
      %v487 = vmul.f32 %v454, %v485
      %v488 = vmul.f32 %v461, %v485
      %v489 = vmul.f32 %v468, %v485
      %v490 = vmul.f32 %v475, %v485
      %v491 = vsel %vm192, %v487, 0.0
      %v492 = vrot.slane %v491, 4
      %v493 = vadd.f32 %v491, %v492
      %v494 = vrot.slane %v493, 2
      %v495 = vadd.f32 %v493, %v494
      %v496 = vrot.slane %v495, 1
      %v497 = vadd.f32 %v495, %v496
      %v498 = vsel %vm192, %v488, 0.0
      %v499 = vrot.slane %v498, 4
      %v500 = vadd.f32 %v498, %v499
      %v501 = vrot.slane %v500, 2
      %v502 = vadd.f32 %v500, %v501
      %v503 = vrot.slane %v502, 1
      %v504 = vadd.f32 %v502, %v503
      %v505 = vsel %vm192, %v489, 0.0
      %v506 = vrot.slane %v505, 4
      %v507 = vadd.f32 %v505, %v506
      %v508 = vrot.slane %v507, 2
      %v509 = vadd.f32 %v507, %v508
      %v510 = vrot.slane %v509, 1
      %v511 = vadd.f32 %v509, %v510
      %v512 = vsel %vm192, %v490, 0.0
      %v513 = vrot.slane %v512, 4
      %v514 = vadd.f32 %v512, %v513
      %v515 = vrot.slane %v514, 2
      %v516 = vadd.f32 %v514, %v515
      %v517 = vrot.slane %v516, 1
      %v518 = vadd.f32 %v516, %v517
      %520 = vset.pattern.permute.xlu0 4
      %521 = vperm.xlu0 %520, %v447
      %v522 = vpop.permute.xlu0 %521
      %v523 = vrot.slane %v522, 1
      %v524 = vrot.slane %v522, 2
      %v525 = vrot.slane %v522, 3
      %v530 = vadd.f32 %v497, %v522
      %v531 = vadd.f32 %v504, %v523
      %v532 = vadd.f32 %v511, %v524
      %v533 = vadd.f32 %v518, %v525
      %v534 = vmax.f32 %v530, 0.0
      %v535 = vmax.f32 %v531, 0.0
      %v536 = vmax.f32 %v532, 0.0
      %v537 = vmax.f32 %v533, 0.0
      %v538 = vadd.f32 %v534, %v440
      %v539 = vadd.f32 %v535, %v441
      %v540 = vadd.f32 %v536, %v442
      %v541 = vadd.f32 %v537, %v443
      %s542 = sadd.s32 %s155, 5
      %s543 = smul.u32 %s542, 4
      %s544 = scalar_lea.vmem %s1, %s543
      %v545 = vld [vmem:[%s544] sm:$0xf]
      %v546 = vlaneseq
      %v547 = vshrl.u32 %v546, 7
      %v548 = vsub.s32 0, %v547
      %v549 = vrot.slane %v545, %v548
      %551 = vbcast.lane.b32.xlu0 %v549, 256
      %v552 = vpop.permute.xlu0 %551
      %v553 = vlaneseq
      %v554 = vshrl.u32 %v553, 7
      %v555 = vsub.s32 1, %v554
      %v556 = vrot.slane %v545, %v555
      %558 = vbcast.lane.b32.xlu0 %v556, 256
      %v559 = vpop.permute.xlu0 %558
      %v560 = vlaneseq
      %v561 = vshrl.u32 %v560, 7
      %v562 = vsub.s32 2, %v561
      %v563 = vrot.slane %v545, %v562
      %565 = vbcast.lane.b32.xlu0 %v563, 256
      %v566 = vpop.permute.xlu0 %565
      %v567 = vlaneseq
      %v568 = vshrl.u32 %v567, 7
      %v569 = vsub.s32 3, %v568
      %v570 = vrot.slane %v545, %v569
      %572 = vbcast.lane.b32.xlu0 %v570, 256
      %v573 = vpop.permute.xlu0 %572
      %v578 = vrot.slane %v539, 7
      %v579 = vsel %vm141, %v578, %v538
      %v580 = vrot.slane %v540, 6
      %v581 = vsel %vm143, %v580, %v579
      %v582 = vrot.slane %v541, 5
      %v583 = vsel %vm145, %v582, %v581
      %v585 = vmul.f32 %v552, %v583
      %v586 = vmul.f32 %v559, %v583
      %v587 = vmul.f32 %v566, %v583
      %v588 = vmul.f32 %v573, %v583
      %v589 = vsel %vm192, %v585, 0.0
      %v590 = vrot.slane %v589, 4
      %v591 = vadd.f32 %v589, %v590
      %v592 = vrot.slane %v591, 2
      %v593 = vadd.f32 %v591, %v592
      %v594 = vrot.slane %v593, 1
      %v595 = vadd.f32 %v593, %v594
      %v596 = vsel %vm192, %v586, 0.0
      %v597 = vrot.slane %v596, 4
      %v598 = vadd.f32 %v596, %v597
      %v599 = vrot.slane %v598, 2
      %v600 = vadd.f32 %v598, %v599
      %v601 = vrot.slane %v600, 1
      %v602 = vadd.f32 %v600, %v601
      %v603 = vsel %vm192, %v587, 0.0
      %v604 = vrot.slane %v603, 4
      %v605 = vadd.f32 %v603, %v604
      %v606 = vrot.slane %v605, 2
      %v607 = vadd.f32 %v605, %v606
      %v608 = vrot.slane %v607, 1
      %v609 = vadd.f32 %v607, %v608
      %v610 = vsel %vm192, %v588, 0.0
      %v611 = vrot.slane %v610, 4
      %v612 = vadd.f32 %v610, %v611
      %v613 = vrot.slane %v612, 2
      %v614 = vadd.f32 %v612, %v613
      %v615 = vrot.slane %v614, 1
      %v616 = vadd.f32 %v614, %v615
      %618 = vset.pattern.permute.xlu0 4
      %619 = vperm.xlu0 %618, %v545
      %v620 = vpop.permute.xlu0 %619
      %v621 = vrot.slane %v620, 1
      %v622 = vrot.slane %v620, 2
      %v623 = vrot.slane %v620, 3
      %v628 = vadd.f32 %v595, %v620
      %v629 = vadd.f32 %v602, %v621
      %v630 = vadd.f32 %v609, %v622
      %v631 = vadd.f32 %v616, %v623
      %v632 = vmax.f32 %v628, 0.0
      %v633 = vmax.f32 %v629, 0.0
      %v634 = vmax.f32 %v630, 0.0
      %v635 = vmax.f32 %v631, 0.0
      %v636 = vadd.f32 %v632, %v538
      %v637 = vadd.f32 %v633, %v539
      %v638 = vadd.f32 %v634, %v540
      %v639 = vadd.f32 %v635, %v541
      %v644 = vrot.slane %v637, 7
      %v645 = vsel %vm141, %v644, %v636
      %v646 = vrot.slane %v638, 6
      %v647 = vsel %vm143, %v646, %v645
      %v648 = vrot.slane %v639, 5
      %v649 = vsel %vm145, %v648, %v647
    $region14: #{skip_connection_forward.1} parent=1 // loop_footer
      %s153 = sadd.s32 1, %s149
    $region15: #{skip_connection_forward.1} parent=1 // loop_footer_branch
      %148 = sbr.rel target = $region11
    $region16: #{skip_connection_forward.1} parent=1 // loop_exit
      _
    %s651 = scalar_lea.vmem %s1, 384
    %v652 = vld [vmem:[%s651] sm:$0xf]
    %v653 = vlaneseq
    %v654 = vshrl.u32 %v653, 7
    %v655 = vsub.s32 0, %v654
    %v656 = vrot.slane %v652, %v655
    %658 = vbcast.lane.b32.xlu0 %v656, 256
    %v659 = vpop.permute.xlu0 %658
    %v660 = vlaneseq
    %v661 = vshrl.u32 %v660, 7
    %v662 = vsub.s32 1, %v661
    %v663 = vrot.slane %v652, %v662
    %665 = vbcast.lane.b32.xlu0 %v663, 256
    %v666 = vpop.permute.xlu0 %665
    %v667 = vlaneseq
    %v668 = vshrl.u32 %v667, 7
    %v669 = vsub.s32 2, %v668
    %v670 = vrot.slane %v652, %v669
    %672 = vbcast.lane.b32.xlu0 %v670, 256
    %v673 = vpop.permute.xlu0 %672
    %v674 = vlaneseq
    %v675 = vshrl.u32 %v674, 7
    %v676 = vsub.s32 3, %v675
    %v677 = vrot.slane %v652, %v676
    %679 = vbcast.lane.b32.xlu0 %v677, 256
    %v680 = vpop.permute.xlu0 %679
    %v681 = vmul.f32 %v659, %v154
    %v682 = vmul.f32 %v666, %v154
    %v683 = vmul.f32 %v673, %v154
    %v684 = vmul.f32 %v680, %v154
    %vm685 = vcmask 60416
    %v686 = vsel %vm685, %v681, 0.0
    %v687 = vrot.slane %v686, 4
    %v688 = vadd.f32 %v686, %v687
    %v689 = vrot.slane %v688, 2
    %v690 = vadd.f32 %v688, %v689
    %v691 = vrot.slane %v690, 1
    %v692 = vadd.f32 %v690, %v691
    %v693 = vsel %vm685, %v682, 0.0
    %v694 = vrot.slane %v693, 4
    %v695 = vadd.f32 %v693, %v694
    %v696 = vrot.slane %v695, 2
    %v697 = vadd.f32 %v695, %v696
    %v698 = vrot.slane %v697, 1
    %v699 = vadd.f32 %v697, %v698
    %v700 = vsel %vm685, %v683, 0.0
    %v701 = vrot.slane %v700, 4
    %v702 = vadd.f32 %v700, %v701
    %v703 = vrot.slane %v702, 2
    %v704 = vadd.f32 %v702, %v703
    %v705 = vrot.slane %v704, 1
    %v706 = vadd.f32 %v704, %v705
    %v707 = vsel %vm685, %v684, 0.0
    %v708 = vrot.slane %v707, 4
    %v709 = vadd.f32 %v707, %v708
    %v710 = vrot.slane %v709, 2
    %v711 = vadd.f32 %v709, %v710
    %v712 = vrot.slane %v711, 1
    %v713 = vadd.f32 %v711, %v712
    %715 = vset.pattern.permute.xlu0 4
    %716 = vperm.xlu0 %715, %v652
    %v717 = vpop.permute.xlu0 %716
    %v718 = vrot.slane %v717, 1
    %v719 = vrot.slane %v717, 2
    %v720 = vrot.slane %v717, 3
    %v725 = vadd.f32 %v692, %v717
    %v726 = vadd.f32 %v699, %v718
    %v727 = vadd.f32 %v706, %v719
    %v728 = vadd.f32 %v713, %v720
    %v729 = vmax.f32 %v725, 0.0
    %v730 = vmax.f32 %v726, 0.0
    %v731 = vmax.f32 %v727, 0.0
    %v732 = vmax.f32 %v728, 0.0
    %s733 = scalar_lea.vmem %s1, 388
    %v734 = vld [vmem:[%s733] sm:$0xf]
    %v735 = vlaneseq
    %v736 = vshrl.u32 %v735, 7
    %v737 = vsub.s32 0, %v736
    %v738 = vrot.slane %v734, %v737
    %740 = vbcast.lane.b32.xlu0 %v738, 256
    %v741 = vpop.permute.xlu0 %740
    %v742 = vlaneseq
    %v743 = vshrl.u32 %v742, 7
    %v744 = vsub.s32 1, %v743
    %v745 = vrot.slane %v734, %v744
    %747 = vbcast.lane.b32.xlu0 %v745, 256
    %v748 = vpop.permute.xlu0 %747
    %v749 = vlaneseq
    %v750 = vshrl.u32 %v749, 7
    %v751 = vsub.s32 2, %v750
    %v752 = vrot.slane %v734, %v751
    %754 = vbcast.lane.b32.xlu0 %v752, 256
    %v755 = vpop.permute.xlu0 %754
    %v756 = vlaneseq
    %v757 = vshrl.u32 %v756, 7
    %v758 = vsub.s32 3, %v757
    %v759 = vrot.slane %v734, %v758
    %761 = vbcast.lane.b32.xlu0 %v759, 256
    %v762 = vpop.permute.xlu0 %761
    %v767 = vrot.slane %v730, 7
    %v768 = vsel %vm141, %v767, %v729
    %v769 = vrot.slane %v731, 6
    %v770 = vsel %vm143, %v769, %v768
    %v771 = vrot.slane %v732, 5
    %v772 = vsel %vm145, %v771, %v770
    %v774 = vmul.f32 %v741, %v772
    %v775 = vmul.f32 %v748, %v772
    %v776 = vmul.f32 %v755, %v772
    %v777 = vmul.f32 %v762, %v772
    %v778 = vsel %vm685, %v774, 0.0
    %v779 = vrot.slane %v778, 4
    %v780 = vadd.f32 %v778, %v779
    %v781 = vrot.slane %v780, 2
    %v782 = vadd.f32 %v780, %v781
    %v783 = vrot.slane %v782, 1
    %v784 = vadd.f32 %v782, %v783
    %v785 = vsel %vm685, %v775, 0.0
    %v786 = vrot.slane %v785, 4
    %v787 = vadd.f32 %v785, %v786
    %v788 = vrot.slane %v787, 2
    %v789 = vadd.f32 %v787, %v788
    %v790 = vrot.slane %v789, 1
    %v791 = vadd.f32 %v789, %v790
    %v792 = vsel %vm685, %v776, 0.0
    %v793 = vrot.slane %v792, 4
    %v794 = vadd.f32 %v792, %v793
    %v795 = vrot.slane %v794, 2
    %v796 = vadd.f32 %v794, %v795
    %v797 = vrot.slane %v796, 1
    %v798 = vadd.f32 %v796, %v797
    %v799 = vsel %vm685, %v777, 0.0
    %v800 = vrot.slane %v799, 4
    %v801 = vadd.f32 %v799, %v800
    %v802 = vrot.slane %v801, 2
    %v803 = vadd.f32 %v801, %v802
    %v804 = vrot.slane %v803, 1
    %v805 = vadd.f32 %v803, %v804
    %807 = vset.pattern.permute.xlu0 4
    %808 = vperm.xlu0 %807, %v734
    %v809 = vpop.permute.xlu0 %808
    %v810 = vrot.slane %v809, 1
    %v811 = vrot.slane %v809, 2
    %v812 = vrot.slane %v809, 3
    %v817 = vadd.f32 %v784, %v809
    %v818 = vadd.f32 %v791, %v810
    %v819 = vadd.f32 %v798, %v811
    %v820 = vadd.f32 %v805, %v812
    %v821 = vmax.f32 %v817, 0.0
    %v822 = vmax.f32 %v818, 0.0
    %v823 = vmax.f32 %v819, 0.0
    %v824 = vmax.f32 %v820, 0.0
    %v826 = vrot.slane %v154, 1
    %v827 = vrot.slane %v154, 2
    %v828 = vrot.slane %v154, 3
    %v833 = vadd.f32 %v821, %v154
    %v834 = vadd.f32 %v822, %v826
    %v835 = vadd.f32 %v823, %v827
    %v836 = vadd.f32 %v824, %v828
    %s837 = scalar_lea.vmem %s1, 392
    %v838 = vld [vmem:[%s837] sm:$0xf]
    %v839 = vlaneseq
    %v840 = vshrl.u32 %v839, 7
    %v841 = vsub.s32 0, %v840
    %v842 = vrot.slane %v838, %v841
    %844 = vbcast.lane.b32.xlu0 %v842, 256
    %v845 = vpop.permute.xlu0 %844
    %v846 = vlaneseq
    %v847 = vshrl.u32 %v846, 7
    %v848 = vsub.s32 1, %v847
    %v849 = vrot.slane %v838, %v848
    %851 = vbcast.lane.b32.xlu0 %v849, 256
    %v852 = vpop.permute.xlu0 %851
    %v853 = vlaneseq
    %v854 = vshrl.u32 %v853, 7
    %v855 = vsub.s32 2, %v854
    %v856 = vrot.slane %v838, %v855
    %858 = vbcast.lane.b32.xlu0 %v856, 256
    %v859 = vpop.permute.xlu0 %858
    %v860 = vlaneseq
    %v861 = vshrl.u32 %v860, 7
    %v862 = vsub.s32 3, %v861
    %v863 = vrot.slane %v838, %v862
    %865 = vbcast.lane.b32.xlu0 %v863, 256
    %v866 = vpop.permute.xlu0 %865
    %v871 = vrot.slane %v834, 7
    %v872 = vsel %vm141, %v871, %v833
    %v873 = vrot.slane %v835, 6
    %v874 = vsel %vm143, %v873, %v872
    %v875 = vrot.slane %v836, 5
    %v876 = vsel %vm145, %v875, %v874
    %v878 = vmul.f32 %v845, %v876
    %v879 = vmul.f32 %v852, %v876
    %v880 = vmul.f32 %v859, %v876
    %v881 = vmul.f32 %v866, %v876
    %v882 = vsel %vm685, %v878, 0.0
    %v883 = vrot.slane %v882, 4
    %v884 = vadd.f32 %v882, %v883
    %v885 = vrot.slane %v884, 2
    %v886 = vadd.f32 %v884, %v885
    %v887 = vrot.slane %v886, 1
    %v888 = vadd.f32 %v886, %v887
    %v889 = vsel %vm685, %v879, 0.0
    %v890 = vrot.slane %v889, 4
    %v891 = vadd.f32 %v889, %v890
    %v892 = vrot.slane %v891, 2
    %v893 = vadd.f32 %v891, %v892
    %v894 = vrot.slane %v893, 1
    %v895 = vadd.f32 %v893, %v894
    %v896 = vsel %vm685, %v880, 0.0
    %v897 = vrot.slane %v896, 4
    %v898 = vadd.f32 %v896, %v897
    %v899 = vrot.slane %v898, 2
    %v900 = vadd.f32 %v898, %v899
    %v901 = vrot.slane %v900, 1
    %v902 = vadd.f32 %v900, %v901
    %v903 = vsel %vm685, %v881, 0.0
    %v904 = vrot.slane %v903, 4
    %v905 = vadd.f32 %v903, %v904
    %v906 = vrot.slane %v905, 2
    %v907 = vadd.f32 %v905, %v906
    %v908 = vrot.slane %v907, 1
    %v909 = vadd.f32 %v907, %v908
    %911 = vset.pattern.permute.xlu0 4
    %912 = vperm.xlu0 %911, %v838
    %v913 = vpop.permute.xlu0 %912
    %v914 = vrot.slane %v913, 1
    %v915 = vrot.slane %v913, 2
    %v916 = vrot.slane %v913, 3
    %v921 = vadd.f32 %v888, %v913
    %v922 = vadd.f32 %v895, %v914
    %v923 = vadd.f32 %v902, %v915
    %v924 = vadd.f32 %v909, %v916
    %v925 = vmax.f32 %v921, 0.0
    %v926 = vmax.f32 %v922, 0.0
    %v927 = vmax.f32 %v923, 0.0
    %v928 = vmax.f32 %v924, 0.0
    %v929 = vadd.f32 %v925, %v833
    %v930 = vadd.f32 %v926, %v834
    %v931 = vadd.f32 %v927, %v835
    %v932 = vadd.f32 %v928, %v836
    %s933 = scalar_lea.vmem %s1, 396
    %v934 = vld [vmem:[%s933] sm:$0xf]
    %v935 = vlaneseq
    %v936 = vshrl.u32 %v935, 7
    %v937 = vsub.s32 0, %v936
    %v938 = vrot.slane %v934, %v937
    %940 = vbcast.lane.b32.xlu0 %v938, 256
    %v941 = vpop.permute.xlu0 %940
    %v942 = vlaneseq
    %v943 = vshrl.u32 %v942, 7
    %v944 = vsub.s32 1, %v943
    %v945 = vrot.slane %v934, %v944
    %947 = vbcast.lane.b32.xlu0 %v945, 256
    %v948 = vpop.permute.xlu0 %947
    %v949 = vlaneseq
    %v950 = vshrl.u32 %v949, 7
    %v951 = vsub.s32 2, %v950
    %v952 = vrot.slane %v934, %v951
    %954 = vbcast.lane.b32.xlu0 %v952, 256
    %v955 = vpop.permute.xlu0 %954
    %v956 = vlaneseq
    %v957 = vshrl.u32 %v956, 7
    %v958 = vsub.s32 3, %v957
    %v959 = vrot.slane %v934, %v958
    %961 = vbcast.lane.b32.xlu0 %v959, 256
    %v962 = vpop.permute.xlu0 %961
    %v967 = vrot.slane %v930, 7
    %v968 = vsel %vm141, %v967, %v929
    %v969 = vrot.slane %v931, 6
    %v970 = vsel %vm143, %v969, %v968
    %v971 = vrot.slane %v932, 5
    %v972 = vsel %vm145, %v971, %v970
    %v974 = vmul.f32 %v941, %v972
    %v975 = vmul.f32 %v948, %v972
    %v976 = vmul.f32 %v955, %v972
    %v977 = vmul.f32 %v962, %v972
    %v978 = vsel %vm685, %v974, 0.0
    %v979 = vrot.slane %v978, 4
    %v980 = vadd.f32 %v978, %v979
    %v981 = vrot.slane %v980, 2
    %v982 = vadd.f32 %v980, %v981
    %v983 = vrot.slane %v982, 1
    %v984 = vadd.f32 %v982, %v983
    %v985 = vsel %vm685, %v975, 0.0
    %v986 = vrot.slane %v985, 4
    %v987 = vadd.f32 %v985, %v986
    %v988 = vrot.slane %v987, 2
    %v989 = vadd.f32 %v987, %v988
    %v990 = vrot.slane %v989, 1
    %v991 = vadd.f32 %v989, %v990
    %v992 = vsel %vm685, %v976, 0.0
    %v993 = vrot.slane %v992, 4
    %v994 = vadd.f32 %v992, %v993
    %v995 = vrot.slane %v994, 2
    %v996 = vadd.f32 %v994, %v995
    %v997 = vrot.slane %v996, 1
    %v998 = vadd.f32 %v996, %v997
    %v999 = vsel %vm685, %v977, 0.0
    %v1000 = vrot.slane %v999, 4
    %v1001 = vadd.f32 %v999, %v1000
    %v1002 = vrot.slane %v1001, 2
    %v1003 = vadd.f32 %v1001, %v1002
    %v1004 = vrot.slane %v1003, 1
    %v1005 = vadd.f32 %v1003, %v1004
    %1007 = vset.pattern.permute.xlu0 4
    %1008 = vperm.xlu0 %1007, %v934
    %v1009 = vpop.permute.xlu0 %1008
    %v1010 = vrot.slane %v1009, 1
    %v1011 = vrot.slane %v1009, 2
    %v1012 = vrot.slane %v1009, 3
    %v1017 = vadd.f32 %v984, %v1009
    %v1018 = vadd.f32 %v991, %v1010
    %v1019 = vadd.f32 %v998, %v1011
    %v1020 = vadd.f32 %v1005, %v1012
    %v1021 = vmax.f32 %v1017, 0.0
    %v1022 = vmax.f32 %v1018, 0.0
    %v1023 = vmax.f32 %v1019, 0.0
    %v1024 = vmax.f32 %v1020, 0.0
    %v1025 = vadd.f32 %v1021, %v929
    %v1026 = vadd.f32 %v1022, %v930
    %v1027 = vadd.f32 %v1023, %v931
    %v1028 = vadd.f32 %v1024, %v932
    %s1029 = scalar_lea.vmem %s1, 400
    %v1030 = vld [vmem:[%s1029] sm:$0xf]
    %v1031 = vlaneseq
    %v1032 = vshrl.u32 %v1031, 7
    %v1033 = vsub.s32 0, %v1032
    %v1034 = vrot.slane %v1030, %v1033
    %1036 = vbcast.lane.b32.xlu0 %v1034, 256
    %v1037 = vpop.permute.xlu0 %1036
    %v1038 = vlaneseq
    %v1039 = vshrl.u32 %v1038, 7
    %v1040 = vsub.s32 1, %v1039
    %v1041 = vrot.slane %v1030, %v1040
    %1043 = vbcast.lane.b32.xlu0 %v1041, 256
    %v1044 = vpop.permute.xlu0 %1043
    %v1049 = vrot.slane %v1026, 7
    %v1050 = vsel %vm141, %v1049, %v1025
    %v1051 = vrot.slane %v1027, 6
    %v1052 = vsel %vm143, %v1051, %v1050
    %v1053 = vrot.slane %v1028, 5
    %v1054 = vsel %vm145, %v1053, %v1052
    %v1056 = vmul.f32 %v1037, %v1054
    %v1057 = vmul.f32 %v1044, %v1054
    %v1058 = vsel %vm685, %v1056, 0.0
    %v1059 = vrot.slane %v1058, 4
    %v1060 = vadd.f32 %v1058, %v1059
    %v1061 = vrot.slane %v1060, 2
    %v1062 = vadd.f32 %v1060, %v1061
    %v1063 = vrot.slane %v1062, 1
    %v1064 = vadd.f32 %v1062, %v1063
    %v1065 = vsel %vm685, %v1057, 0.0
    %v1066 = vrot.slane %v1065, 4
    %v1067 = vadd.f32 %v1065, %v1066
    %v1068 = vrot.slane %v1067, 2
    %v1069 = vadd.f32 %v1067, %v1068
    %v1070 = vrot.slane %v1069, 1
    %v1071 = vadd.f32 %v1069, %v1070
    %1073 = vset.pattern.permute.xlu0 4
    %1074 = vperm.xlu0 %1073, %v1030
    %v1075 = vpop.permute.xlu0 %1074
    %v1076 = vrot.slane %v1075, 1
    %v1079 = vadd.f32 %v1064, %v1075
    %v1080 = vadd.f32 %v1071, %v1076
    %v1083 = vrot.slane %v1080, 7
    %v1084 = vsel %vm141, %v1083, %v1079
    %vm1086 = vcmask 58368
    %1087 = vst.msk [vmem:[#allocation2] sm:$0x3] %vm1086, %v1084
    // Predicated region
    $region17: #{skip_connection_forward.1} parent=1 // pred_check
      _
    $region18: #{skip_connection_forward.1} parent=1 // pred_check_branch
      %1089 = sbr.rel (0) target = $region20
    $region19: #{skip_connection_forward.1} parent=1 // pred_region
      %s1091 = ssub.s32 32, 32
      %1092 = vsyncadd [#allocation3], %s1091
      %s1094 = sshll.u32 [#allocation2], 4
      %s1095 = int_to_ptr.vmem [resolvable:$true] %s1094
      %1097 = dma.vmem_to_hbm [thread:$0]  %s1095, 32, %s2, [#allocation3]
    $region20: #{skip_connection_forward.1} parent=1 // pred_fallthru
      _
    // Predicated region
    $region21: #{skip_connection_forward.1} parent=1 // pred_check
      _
    $region22: #{skip_connection_forward.1} parent=1 // pred_check_branch
      %1099 = sbr.rel (0) target = $region24
    $region23: #{skip_connection_forward.1} parent=1 // pred_region
      %1100 = dma.done [#allocation3], 32
    $region24: #{skip_connection_forward.1} parent=1 // pred_fallthru
      _
    %1101 = vsyncpa [#allocation3], 1

</llo_original>
